<compile_context>
chip_gen: v5e
topology: v5e:2x2
jax: 0.10.0
libtpu: 0.0.40
codegen_flags: <defaults>
</compile_context>

<pallas_src>
import math

import jax
import jax.numpy as jnp
from jax.experimental import pallas as pl
from jax.experimental.pallas import tpu as pltpu


_SQRT_EPS = float(math.sqrt(jnp.finfo(jnp.float32).eps))
_HALF_LOG_2PI = 0.5 * math.log(2.0 * math.pi)


# ----------------------------- Pallas kernel ---------------------------------
def ziln_head_kernel(xT_ref, wT_ref, b_ref, labelT_ref, out_ref):
    # xT: [H, TB]  (batch on lanes), wT: [8, H], b: [8, 1], label: [1, TB]
    xT = xT_ref[...]
    wT = wT_ref[...]
    bias = b_ref[...]

    # DNN([hidden_dim, 3]) head, computed transposed so batch stays on lanes.
    # Rows 0..2 = (p_logit, mu, s_raw); rows 3..7 are zero padding.
    logits8 = jnp.dot(wT, xT, preferred_element_type=jnp.float32) + bias  # [8, TB]

    label = labelT_ref[...]                              # [1, TB]
    p_pred = logits8[0:1, :]
    mu = logits8[1:2, :]

    # Fused softplus over the 3 live rows (one exp/log1p pass instead of two):
    #   softplus(x) = max(x, 0) + log1p(exp(-|x|))
    head3 = logits8[0:3, :]
    sp3 = jnp.maximum(head3, 0.0) + jnp.log1p(jnp.exp(-jnp.abs(head3)))   # [3, TB]
    softplus_s = sp3[2:3, :]

    # ---- ZILN loss (per-example; reduced in the wrapper) ----
    p_ground = (label > 0.0).astype(jnp.float32)
    # BCEWithLogits(reduction='none') = softplus(x) - x*y
    cls_loss = sp3[0:1, :] - p_pred * p_ground

    sigma = jnp.maximum(softplus_s, _SQRT_EPS)
    safe_labels = p_ground * label + (1.0 - p_ground)
    log_x = jnp.log(safe_labels)
    log_sigma = jnp.log(sigma)
    z = log_x - mu
    # LogNormal(mu, sigma).log_prob(x) = -log x - log sigma - 0.5*log(2*pi) - (log x - mu)^2/(2 sigma^2)
    log_prob = -log_x - log_sigma - _HALF_LOG_2PI - 0.5 * z * z / (sigma * sigma)
    per_ex_loss = cls_loss - p_ground * log_prob         # [1, TB]

    # ---- ZILN predict ----
    p = 1.0 / (1.0 + jnp.exp(-p_pred))
    value = p * jnp.exp(mu + 0.5 * softplus_s * softplus_s)   # predict path: no eps clamp

    # Packed lane-dense output slab [8, TB].
    out_ref[0:3, :] = logits8[0:3, :]
    out_ref[3:4, :] = p
    out_ref[4:5, :] = value
    out_ref[5:6, :] = per_ex_loss
    out_ref[6:8, :] = jnp.zeros((2, out_ref.shape[1]), jnp.float32)


def _round_up(x, m):
    return (x + m - 1) // m * m


def ziln_forward(flatten_hidden, w, b, labels):
    B, H = flatten_hidden.shape

    # Batch padded to a lane multiple; tile size capped so double-buffered input
    # blocks stay far below even v7x's 64 MiB VMEM.
    B_pad = _round_up(B, 128)
    TB = 128
    for cand in (512, 256, 128):
        if B_pad % cand == 0:
            TB = cand
            break

    # Put batch on the lane axis (no f32 pre-cast pass: data is used as-is).
    xT = flatten_hidden.T                                      # [H, B]
    labels_f = labels.astype(jnp.float32)
    if B_pad != B:
        xT = jnp.pad(xT, ((0, 0), (0, B_pad - B)))
        labels_f = jnp.pad(labels_f, (0, B_pad - B))
    labelT = labels_f.reshape(1, B_pad)

    # Head params: transposed + zero-padded to 8 rows (done once, tiny).
    wT_pad = jnp.zeros((8, H), jnp.float32).at[0:3, :].set(w.T.astype(jnp.float32))
    b_pad = jnp.zeros((8, 1), jnp.float32).at[0:3, 0].set(b.astype(jnp.float32))

    out = pl.pallas_call(
        ziln_head_kernel,
        out_shape=jax.ShapeDtypeStruct((8, B_pad), jnp.float32),
        grid_spec=pltpu.PrefetchScalarGridSpec(
            num_scalar_prefetch=0,
            grid=(B_pad // TB,),
            in_specs=[
                pl.BlockSpec((H, TB), lambda i: (0, i)),   # xT tile, batch on lanes
                pl.BlockSpec((8, H), lambda i: (0, 0)),    # wT (resident)
                pl.BlockSpec((8, 1), lambda i: (0, 0)),    # bias (resident)
                pl.BlockSpec((1, TB), lambda i: (0, i)),   # labels, lane-dense
            ],
            out_specs=pl.BlockSpec((8, TB), lambda i: (0, i)),
        ),
        compiler_params=pltpu.CompilerParams(
            dimension_semantics=("parallel",)),
    )(xT, wT_pad, b_pad, labelT)

    logits = out[0:3, :B].T                                    # [B, 3]
    p = out[3, :B]
    value = out[4, :B]
    loss = jnp.sum(out[5, :B]) / B                             # mean over real batch only
    return {
        "logit": logits,
        "loss": loss,
        "prediction_p": p,
        "prediction_v": value,
    }


# ----------------------------- JAX glue (embedding) --------------------------
SPARSE_FEATURES = ["cat_a", "cat_b", "cat_c", "cat_d"]
DENSE_FEATURES = ["dense_a", "dense_b"]
VOCAB = 10
SPARSE_DIM = 4
DENSE_DIM = 4
DAPAN_DIM = 16
HIDDEN_DIM = len(SPARSE_FEATURES) * SPARSE_DIM + len(DENSE_FEATURES) * DENSE_DIM + DAPAN_DIM


def init_params(key):
    params = {}
    keys = jax.random.split(key, len(SPARSE_FEATURES) + len(DENSE_FEATURES) + 3)
    i = 0
    for name in SPARSE_FEATURES:
        params[f"emb_{name}"] = 0.1 * jax.random.normal(keys[i], (VOCAB, SPARSE_DIM), jnp.float32)
        i += 1
    for name in DENSE_FEATURES:
        params[f"dense_w_{name}"] = 0.1 * jax.random.normal(keys[i], (DENSE_DIM,), jnp.float32)
        i += 1
    params["dapan_w"] = 0.1 * jax.random.normal(keys[i], (DAPAN_DIM,), jnp.float32); i += 1
    params["head_w"] = 0.1 * jax.random.normal(keys[i], (HIDDEN_DIM, 3), jnp.float32); i += 1
    params["head_b"] = jnp.zeros((3,), jnp.float32)
    return params


def embedding_left(features, params):
    # Sparse: table lookup (gather kept in glue); dense: scalar * learned projection vector.
    embs = []
    for name in SPARSE_FEATURES:
        embs.append(jnp.take(params[f"emb_{name}"], features[name], axis=0))
    for name in DENSE_FEATURES:
        embs.append(features[name][:, None] * params[f"dense_w_{name}"][None, :])
    embs.append(features["dapan"][:, None] * params["dapan_w"][None, :])
    return jnp.concatenate(embs, axis=-1)  # [B, HIDDEN_DIM]


# ----------------------------- reference (pure JAX) ---------------------------
def ziln_reference(flatten_hidden, w, b, labels):
    logits = flatten_hidden @ w + b[None, :]
    p_pred, mu, s_raw = logits[:, 0], logits[:, 1], logits[:, 2]
    p_ground = (labels > 0.0).astype(jnp.float32)
    cls_loss = (jnp.maximum(p_pred, 0.0) - p_pred * p_ground
                + jnp.log1p(jnp.exp(-jnp.abs(p_pred))))
    sp = jnp.maximum(s_raw, 0.0) + jnp.log1p(jnp.exp(-jnp.abs(s_raw)))
    sigma = jnp.maximum(sp, jnp.sqrt(jnp.finfo(jnp.float32).eps))
    safe = p_ground * labels + (1.0 - p_ground)
    logx = jnp.log(safe)
    logprob = (-logx - jnp.log(sigma) - 0.5 * jnp.log(2.0 * jnp.pi)
               - jnp.square(logx - mu) / (2.0 * jnp.square(sigma)))
    loss = jnp.mean(cls_loss - p_ground * logprob)
    p = jax.nn.sigmoid(p_pred)
    value = p * jnp.exp(mu + 0.5 * jnp.square(sp))
    return logits, loss, p, value


# ----------------------------- main -------------------------------------------
if __name__ == "__main__":
    key = jax.random.PRNGKey(0)
    k_param, k_sparse, k_dense, k_label = jax.random.split(key, 4)

    B = 8
    params = init_params(k_param)

    sparse_keys = jax.random.split(k_sparse, len(SPARSE_FEATURES))
    dense_keys = jax.random.split(k_dense, len(DENSE_FEATURES) + 1)
    features = {}
    for i, name in enumerate(SPARSE_FEATURES):
        features[name] = jax.random.randint(sparse_keys[i], (B,), 0, VOCAB)
    for i, name in enumerate(DENSE_FEATURES):
        features[name] = jax.random.uniform(dense_keys[i], (B,), jnp.float32)
    features["dapan"] = jax.random.uniform(dense_keys[-1], (B,), jnp.float32)

    # half-zero / half-positive labels to exercise both ZILN branches
    raw = jax.random.uniform(k_label, (B,), jnp.float32, 0.5, 5.0)
    mask = (jnp.arange(B) % 2 == 0).astype(jnp.float32)
    labels = raw * mask

    flatten_hidden = embedding_left(features, params)          # [B, HIDDEN_DIM]

    out = ziln_forward(flatten_hidden, params["head_w"], params["head_b"], labels)
    jax.block_until_ready(out)

    ref_logits, ref_loss, ref_p, ref_v = ziln_reference(
        flatten_hidden, params["head_w"], params["head_b"], labels)
    assert jnp.allclose(out["logit"], ref_logits, atol=1e-5, rtol=1e-5)
    assert jnp.allclose(out["loss"], ref_loss, atol=1e-5, rtol=1e-5)
    assert jnp.allclose(out["prediction_p"], ref_p, atol=1e-5, rtol=1e-5)
    assert jnp.allclose(out["prediction_v"], ref_v, atol=1e-4, rtol=1e-4)

    print("KERNEL_OK")
</pallas_src>

<mosaic_0001>
module attributes {stable_mosaic.version = 11 : i64} {
  func.func @ziln_head_kernel(%arg0: i32, %arg1: memref<40x128xf32, #tpu.memory_space<vmem>>, %arg2: memref<8x40xf32, #tpu.memory_space<vmem>>, %arg3: memref<8x1xf32, #tpu.memory_space<vmem>>, %arg4: memref<1x128xf32, #tpu.memory_space<vmem>>, %arg5: memref<8x128xf32, #tpu.memory_space<vmem>>) attributes {dimension_semantics = [#tpu.dimension_semantics<parallel>], iteration_bounds = array<i64: 1>, scalar_prefetch = 0 : i64, scratch_operands = 0 : i64, tpu.core_type = #tpu.core_type<tc>, window_params = [{transform_indices = @transform_0, window_bounds = array<i64: 40, 128>}, {pipeline_mode = #tpu.pipeline_mode<synchronous>, transform_indices = @transform_1, window_bounds = array<i64: 8, 40>}, {pipeline_mode = #tpu.pipeline_mode<synchronous>, transform_indices = @transform_2, window_bounds = array<i64: 8, 1>}, {transform_indices = @transform_3, window_bounds = array<i64: 1, 128>}, {transform_indices = @transform_4, window_bounds = array<i64: 8, 128>}]} {
    %c0 = arith.constant 0 : index
    %c0_0 = arith.constant 0 : index
    %0 = vector.load %arg1[%c0, %c0_0] : memref<40x128xf32, #tpu.memory_space<vmem>>, vector<40x128xf32>
    %c0_1 = arith.constant 0 : index
    %c0_2 = arith.constant 0 : index
    %1 = vector.load %arg2[%c0_1, %c0_2] : memref<8x40xf32, #tpu.memory_space<vmem>>, vector<8x40xf32>
    %c0_3 = arith.constant 0 : index
    %c0_4 = arith.constant 0 : index
    %2 = vector.load %arg3[%c0_3, %c0_4] : memref<8x1xf32, #tpu.memory_space<vmem>>, vector<8x1xf32>
    %cst = arith.constant dense<0.000000e+00> : vector<8x128xf32>
    %3 = tpu.matmul %1, %0, %cst {dimension_numbers = #tpu.dot_dimension_numbers<[1], [0], [0], [1], [0, 0, 1, 1], [], []>} : vector<8x40xf32>, vector<40x128xf32>, vector<8x128xf32> -> vector<8x128xf32>
    %4 = vector.broadcast %2 : vector<8x1xf32> to vector<8x128xf32>
    %5 = arith.addf %3, %4 : vector<8x128xf32>
    %c0_5 = arith.constant 0 : index
    %c0_6 = arith.constant 0 : index
    %6 = vector.load %arg4[%c0_5, %c0_6] : memref<1x128xf32, #tpu.memory_space<vmem>>, vector<1x128xf32>
    %7 = vector.extract_strided_slice %5 {offsets = [0, 0], sizes = [1, 128], strides = [1, 1]} : vector<8x128xf32> to vector<1x128xf32>
    %8 = vector.extract_strided_slice %5 {offsets = [1, 0], sizes = [1, 128], strides = [1, 1]} : vector<8x128xf32> to vector<1x128xf32>
    %9 = vector.extract_strided_slice %5 {offsets = [0, 0], sizes = [3, 128], strides = [1, 1]} : vector<8x128xf32> to vector<3x128xf32>
    %cst_7 = arith.constant 0.000000e+00 : f32
    %10 = vector.broadcast %cst_7 : f32 to vector<3x128xf32>
    %11 = arith.maximumf %9, %10 : vector<3x128xf32>
    %12 = math.absf %9 : vector<3x128xf32>
    %cst_8 = arith.constant 0.000000e+00 : f32
    %13 = vector.broadcast %cst_8 : f32 to vector<3x128xf32>
    %14 = arith.subf %13, %12 : vector<3x128xf32>
    %15 = math.exp %14 : vector<3x128xf32>
    %16 = math.log1p %15 : vector<3x128xf32>
    %17 = arith.addf %11, %16 : vector<3x128xf32>
    %18 = vector.extract_strided_slice %17 {offsets = [2, 0], sizes = [1, 128], strides = [1, 1]} : vector<3x128xf32> to vector<1x128xf32>
    %cst_9 = arith.constant 0.000000e+00 : f32
    %19 = vector.broadcast %cst_9 : f32 to vector<1x128xf32>
    %20 = arith.cmpf ogt, %6, %19 : vector<1x128xf32>
    %21 = arith.extui %20 : vector<1x128xi1> to vector<1x128xi32>
    %22 = arith.sitofp %21 : vector<1x128xi32> to vector<1x128xf32>
    %23 = vector.extract_strided_slice %17 {offsets = [0, 0], sizes = [1, 128], strides = [1, 1]} : vector<3x128xf32> to vector<1x128xf32>
    %24 = arith.mulf %7, %22 : vector<1x128xf32>
    %25 = arith.subf %23, %24 : vector<1x128xf32>
    %cst_10 = arith.constant 3.45266977E-4 : f32
    %26 = vector.broadcast %cst_10 : f32 to vector<1x128xf32>
    %27 = arith.maximumf %18, %26 : vector<1x128xf32>
    %28 = arith.mulf %22, %6 : vector<1x128xf32>
    %cst_11 = arith.constant 1.000000e+00 : f32
    %29 = vector.broadcast %cst_11 : f32 to vector<1x128xf32>
    %30 = arith.subf %29, %22 : vector<1x128xf32>
    %31 = arith.addf %28, %30 : vector<1x128xf32>
    %32 = math.log %31 : vector<1x128xf32>
    %33 = math.log %27 : vector<1x128xf32>
    %34 = arith.subf %32, %8 : vector<1x128xf32>
    %cst_12 = arith.constant 0.000000e+00 : f32
    %35 = vector.broadcast %cst_12 : f32 to vector<1x128xf32>
    %36 = arith.subf %35, %32 : vector<1x128xf32>
    %37 = arith.subf %36, %33 : vector<1x128xf32>
    %cst_13 = arith.constant 0.918938517 : f32
    %38 = vector.broadcast %cst_13 : f32 to vector<1x128xf32>
    %39 = arith.subf %37, %38 : vector<1x128xf32>
    %cst_14 = arith.constant 5.000000e-01 : f32
    %40 = vector.broadcast %cst_14 : f32 to vector<1x128xf32>
    %41 = arith.mulf %40, %34 : vector<1x128xf32>
    %42 = arith.mulf %41, %34 : vector<1x128xf32>
    %43 = arith.mulf %27, %27 : vector<1x128xf32>
    %44 = arith.divf %42, %43 : vector<1x128xf32>
    %45 = arith.subf %39, %44 : vector<1x128xf32>
    %46 = arith.mulf %22, %45 : vector<1x128xf32>
    %47 = arith.subf %25, %46 : vector<1x128xf32>
    %cst_15 = arith.constant 0.000000e+00 : f32
    %48 = vector.broadcast %cst_15 : f32 to vector<1x128xf32>
    %49 = arith.subf %48, %7 : vector<1x128xf32>
    %50 = math.exp %49 : vector<1x128xf32>
    %cst_16 = arith.constant 1.000000e+00 : f32
    %51 = vector.broadcast %cst_16 : f32 to vector<1x128xf32>
    %52 = arith.addf %51, %50 : vector<1x128xf32>
    %cst_17 = arith.constant 1.000000e+00 : f32
    %53 = vector.broadcast %cst_17 : f32 to vector<1x128xf32>
    %54 = arith.divf %53, %52 : vector<1x128xf32>
    %cst_18 = arith.constant 5.000000e-01 : f32
    %55 = vector.broadcast %cst_18 : f32 to vector<1x128xf32>
    %56 = arith.mulf %55, %18 : vector<1x128xf32>
    %57 = arith.mulf %56, %18 : vector<1x128xf32>
    %58 = arith.addf %8, %57 : vector<1x128xf32>
    %59 = math.exp %58 : vector<1x128xf32>
    %60 = arith.mulf %54, %59 : vector<1x128xf32>
    %61 = vector.extract_strided_slice %5 {offsets = [0, 0], sizes = [3, 128], strides = [1, 1]} : vector<8x128xf32> to vector<3x128xf32>
    %c0_19 = arith.constant 0 : index
    %c0_20 = arith.constant 0 : index
    %62 = vector.load %arg5[%c0_19, %c0_20] : memref<8x128xf32, #tpu.memory_space<vmem>>, vector<3x128xf32>
    tpu.vector_store %arg5[%c0_19, %c0_20], %61 {strides = array<i32>} : memref<8x128xf32, #tpu.memory_space<vmem>>, vector<3x128xf32>,
    %c3 = arith.constant 3 : index
    %c0_21 = arith.constant 0 : index
    %63 = vector.load %arg5[%c3, %c0_21] : memref<8x128xf32, #tpu.memory_space<vmem>>, vector<1x128xf32>
    tpu.vector_store %arg5[%c3, %c0_21], %54 {strides = array<i32>} : memref<8x128xf32, #tpu.memory_space<vmem>>, vector<1x128xf32>,
    %c4 = arith.constant 4 : index
    %c0_22 = arith.constant 0 : index
    %64 = vector.load %arg5[%c4, %c0_22] : memref<8x128xf32, #tpu.memory_space<vmem>>, vector<1x128xf32>
    tpu.vector_store %arg5[%c4, %c0_22], %60 {strides = array<i32>} : memref<8x128xf32, #tpu.memory_space<vmem>>, vector<1x128xf32>,
    %c5 = arith.constant 5 : index
    %c0_23 = arith.constant 0 : index
    %65 = vector.load %arg5[%c5, %c0_23] : memref<8x128xf32, #tpu.memory_space<vmem>>, vector<1x128xf32>
    tpu.vector_store %arg5[%c5, %c0_23], %47 {strides = array<i32>} : memref<8x128xf32, #tpu.memory_space<vmem>>, vector<1x128xf32>,
    %cst_24 = arith.constant 0.000000e+00 : f32
    %66 = vector.broadcast %cst_24 : f32 to vector<2x128xf32>
    %c6 = arith.constant 6 : index
    %c0_25 = arith.constant 0 : index
    %67 = vector.load %arg5[%c6, %c0_25] : memref<8x128xf32, #tpu.memory_space<vmem>>, vector<2x128xf32>
    tpu.vector_store %arg5[%c6, %c0_25], %66 {strides = array<i32>} : memref<8x128xf32, #tpu.memory_space<vmem>>, vector<2x128xf32>,
    return
  }
  func.func @transform_0(%arg0: i32) -> (i32, i32) {
    %c0_i32 = arith.constant 0 : i32
    %c0_i32_0 = arith.constant 0 : i32
    return %c0_i32, %arg0 : i32, i32
  }
  func.func @transform_1(%arg0: i32) -> (i32, i32) {
    %c0_i32 = arith.constant 0 : i32
    %c0_i32_0 = arith.constant 0 : i32
    %c0_i32_1 = arith.constant 0 : i32
    return %c0_i32, %c0_i32_0 : i32, i32
  }
  func.func @transform_2(%arg0: i32) -> (i32, i32) {
    %c0_i32 = arith.constant 0 : i32
    %c0_i32_0 = arith.constant 0 : i32
    %c0_i32_1 = arith.constant 0 : i32
    return %c0_i32, %c0_i32_0 : i32, i32
  }
  func.func @transform_3(%arg0: i32) -> (i32, i32) {
    %c0_i32 = arith.constant 0 : i32
    %c0_i32_0 = arith.constant 0 : i32
    return %c0_i32, %arg0 : i32, i32
  }
  func.func @transform_4(%arg0: i32) -> (i32, i32) {
    %c0_i32 = arith.constant 0 : i32
    %c0_i32_0 = arith.constant 0 : i32
    return %c0_i32, %arg0 : i32, i32
  }
}

</mosaic_0001>

<llo_original>
// kernel: tpu_custom_call.1
$region0: #{tpu_custom_call.1}
  #allocation0 [shape = 'u32[]', space=smem, size = 0x4, offset = 0x4, fixed_abs, tag = 'smem constant byte address 0x4 - core index']
  #allocation1 [shape = 'u32[72,128]{1,0:T(1,128)}', space=vmem, size = 0x9000, scoped, tag = 'internal scratch']
  %s0 = inlined_call_operand.hbm [shape: f32[40,128], index: 0, kind: input, shape index: {}]
  %s1 = inlined_call_operand.vmem [shape: f32[8,40], index: 1, kind: input, shape index: {}]
  %s2 = inlined_call_operand.vmem [shape: f32[8,1], index: 2, kind: input, shape index: {}]
  %s3 = inlined_call_operand.vmem [shape: f32[1,128], index: 3, kind: input, shape index: {}]
  %s4 = inlined_call_operand.hbm [shape: f32[8,128], index: 4, kind: output, shape index: {}]
  %s5 = sld [smem:[#allocation0]]
  $region30: #{tpu_custom_call.1} parent=0
    _
  %s7 = ssub.s32 1, %s5
  %s8 = scalar_select 0, %s7, %s5
  $region1: #{tpu_custom_call.1} parent=0
    #allocation2 [shape = 'u8[20480]{0}', space=vmem, size = 0x5000, scoped, tag = 'input window, operand 0, single buffered']
    #allocation3 [shape = 's32[1]{0}', space=sflag, size = 0x4, scoped, tag = 'scoped memory for tpu_custom_call.1']
    #allocation4 [shape = 's32[1]{0}', space=sflag, size = 0x4, scoped, tag = 'scoped memory for tpu_custom_call.1']
    #allocation5 [shape = 'u8[4096]{0}', space=vmem, size = 0x1000, scoped, tag = 'output window, operand 0, single buffered']
    %9 = vsyncpa [#allocation3], 0
    %10 = vsyncpa [#allocation4], 0
    // Predicated region
    $region2: #{tpu_custom_call.1} parent=1 // pred_check
      _
    $region3: #{tpu_custom_call.1} parent=1 // pred_check_branch
      %12 = sbr.rel (0) target = $region5
    $region4: #{tpu_custom_call.1} parent=1 // pred_region
      %14 = vsyncadd [#allocation3], 0
      %s15 = sshll.u32 %s0, 4
      %s16 = int_to_ptr.hbm [resolvable:$true] %s15
      %s17 = sshll.u32 [#allocation2], 4
      %s18 = int_to_ptr.vmem [resolvable:$true] %s17
      %23 = dma.hbm_to_vmem [thread:$0]  %s16, 640, %s18, [#allocation3], 128, 128, 8
    $region5: #{tpu_custom_call.1} parent=1 // pred_fallthru
      _
    // Predicated region
    $region6: #{tpu_custom_call.1} parent=1 // pred_check
      _
    $region7: #{tpu_custom_call.1} parent=1 // pred_check_branch
      %25 = sbr.rel (0) target = $region9
    $region8: #{tpu_custom_call.1} parent=1 // pred_region
      _
    $region9: #{tpu_custom_call.1} parent=1 // pred_fallthru
      _
    // Predicated region
    $region10: #{tpu_custom_call.1} parent=1 // pred_check
      _
    $region11: #{tpu_custom_call.1} parent=1 // pred_check_branch
      %27 = sbr.rel (0) target = $region13
    $region12: #{tpu_custom_call.1} parent=1 // pred_region
      _
    $region13: #{tpu_custom_call.1} parent=1 // pred_fallthru
      _
    // Predicated region
    $region14: #{tpu_custom_call.1} parent=1 // pred_check
      _
    $region15: #{tpu_custom_call.1} parent=1 // pred_check_branch
      %29 = sbr.rel (0) target = $region17
    $region16: #{tpu_custom_call.1} parent=1 // pred_region
      _
    $region17: #{tpu_custom_call.1} parent=1 // pred_fallthru
      _
    // Predicated region
    $region18: #{tpu_custom_call.1} parent=1 // pred_check
      _
    $region19: #{tpu_custom_call.1} parent=1 // pred_check_branch
      %31 = sbr.rel (0) target = $region21
    $region20: #{tpu_custom_call.1} parent=1 // pred_region
      %33 = dma.done [#allocation3], 640
    $region21: #{tpu_custom_call.1} parent=1 // pred_fallthru
      _
    %v34 = vld [vmem:[#allocation2] sm:$0xff]
    %v35 = vld [vmem:[#allocation2 + $0x8] sm:$0xff]
    %v36 = vld [vmem:[#allocation2 + $0x10] sm:$0xff]
    %v37 = vld [vmem:[#allocation2 + $0x18] sm:$0xff]
    %v38 = vld [vmem:[#allocation2 + $0x20] sm:$0xff]
    %v39 = vld [vmem:[%s1] sm:$0xff]
    %v40 = vld [vmem:[%s2] sm:$0xff]
    %42 = vset.pattern.permute.xlu0 0
    %43 = vperm.xlu0 %42, %v40
    %v44 = vpop.permute.xlu0 %43
    %vm46 = vcmask 326656
    %v48 = vsel %vm46, %v39, 0
    %50 = vmatpush.msra.mxu0 0.0
    %51 = vmatpush.msra.mxu0 0.0
    %52 = vmatpush.msra.mxu0 0.0
    %53 = vmatpush.msra.mxu0 0.0
    %54 = vmatpush.msra.mxu0 0.0
    %55 = vmatpush.msra.mxu0 0.0
    %56 = vmatpush.msra.mxu0 0.0
    %57 = vmatpush.msra.mxu0 0.0
    %58 = vmatpush.msra.mxu0 0.0
    %59 = vmatpush.msra.mxu0 0.0
    %60 = vmatpush.msra.mxu0 0.0
    %61 = vmatpush.msra.mxu0 %v38
    %62 = vmatpush.msra.mxu0 %v37
    %63 = vmatpush.msra.mxu0 %v36
    %64 = vmatpush.msra.mxu0 %v35
    %65 = vmatpush.msra.mxu0 %v34
    %66 = vmatmul.f32.gmra.mxu0 %v48
    %v67 = vpop.f32.mrf.mxu0
    %v68 = vadd.f32 %v44, %v67
    %69 = vdwg.mxu0
    %v70 = vld [vmem:[%s3] sm:$0x1]
    %v71 = vmax.f32 %v68, 0.0
    %v72 = vand.u32 2147483647, %v68
    %v73 = vsub.f32 0.0, %v72
    %v74 = vmul.f32 %v73, 1.442695
    %v75 = vpow.pop %v74
    %v76 = vadd.f32 %v75, 1.0
    %v77 = vlog2.pop %v76
    %v78 = vmul.f32 %v77, 0.6931472
    %v79 = vmul.f32 -0.5, %v75
    %v80 = vadd.f32 %v79, 1.0
    %v81 = vmul.f32 %v80, %v75
    %v82 = vand.u32 2147483647, %v75
    %vm83 = vcmp.lt.f32.partialorder %v82, 0.0004427343
    %v84 = vsel %vm83, %v81, %v78
    %v85 = vadd.f32 %v71, %v84
    %vm86 = vcmp.gt.f32.partialorder %v70, 0.0
    %v87 = vsel %vm86, 1, 0
    %v88 = vcvt.s32.f32 %v87
    %v89 = vmul.f32 %v68, %v88
    %v90 = vsub.f32 %v85, %v89
    %v91 = vmax.f32 %v85, 0.00034526698
    %v92 = vmul.f32 %v88, %v70
    %v93 = vsub.f32 1.0, %v88
    %v94 = vadd.f32 %v92, %v93
    %v95 = vlog2.pop %v94
    %v96 = vmul.f32 %v95, 0.6931472
    %v97 = vlog2.pop %v91
    %v98 = vmul.f32 %v97, 0.6931472
    %100 = vst [vmem:[#allocation1] sm:$0xff] %v68
    %s101 = scalar_lea.vmem [#allocation1], 1
    %v102 = vld [vmem:[%s101] ss:$9 sm:$0xff]
    %v104 = vsub.f32 %v96, %v102
    %v105 = vsub.f32 0.0, %v96
    %107 = vst [vmem:[#allocation1] sm:$0xff] %v98
    %s108 = scalar_lea.vmem [#allocation1], 2
    %v109 = vld [vmem:[%s108] ss:$9 sm:$0xff]
    %v111 = vsub.f32 %v105, %v109
    %v112 = vsub.f32 %v111, 0.9189385
    %v113 = vmul.f32 %v104, 0.5
    %v114 = vmul.f32 %v113, %v104
    %v115 = vmul.f32 %v91, %v91
    %117 = vst [vmem:[#allocation1] sm:$0xff] %v115
    %s118 = scalar_lea.vmem [#allocation1], 2
    %v119 = vld [vmem:[%s118] ss:$9 sm:$0xff]
    %v121 = vrcp.pop %v119
    %v122 = vmul.f32 %v119, %v121
    %v123 = vsub.f32 1.0, %v122
    %v124 = vmul.f32 %v121, %v123
    %v125 = vadd.f32 %v121, %v124
    %vm126 = vweird.f32 %v119
    %vm127 = vweird.f32 %v121
    %vm128 = vmor %vm126, %vm127
    %v129 = vsel %vm128, %v121, %v125
    %v130 = vand.u32 2147483647, %v119
    %vm131 = vcmp.eq.f32.partialorder %v130, 8.507059e+37
    %v132 = vand.u32 %v119, 2147483648
    %v133 = vor.u32 1.1754944e-38, %v132
    %v134 = vsel %vm131, %v133, %v129
    %v135 = vmul.f32 %v114, %v134
    %v136 = vsub.f32 %v112, %v135
    %v137 = vmul.f32 %v88, %v136
    %v138 = vsub.f32 %v90, %v137
    %v139 = vsub.f32 0.0, %v68
    %v140 = vmul.f32 %v139, 1.442695
    %v141 = vpow.pop %v140
    %v142 = vadd.f32 %v141, 1.0
    %v143 = vrcp.pop %v142
    %v144 = vmul.f32 %v142, %v143
    %v145 = vsub.f32 1.0, %v144
    %v146 = vmul.f32 %v143, %v145
    %v147 = vadd.f32 %v143, %v146
    %vm148 = vweird.f32 %v142
    %vm149 = vweird.f32 %v143
    %vm150 = vmor %vm148, %vm149
    %v151 = vsel %vm150, %v143, %v147
    %v152 = vand.u32 2147483647, %v142
    %vm153 = vcmp.eq.f32.partialorder %v152, 8.507059e+37
    %v154 = vand.u32 %v142, 2147483648
    %v155 = vor.u32 1.1754944e-38, %v154
    %v156 = vsel %vm153, %v155, %v151
    %v157 = vmul.f32 1.0, %v156
    %v158 = vmul.f32 %v85, 0.5
    %v159 = vmul.f32 %v158, %v85
    %v161 = vrot.slane %v159, 1
    %v163 = vadd.f32 %v68, %v161
    %v164 = vmul.f32 %v163, 1.442695
    %v165 = vpow.pop %v164
    %v167 = vrot.slane %v165, 1
    %v169 = vmul.f32 %v157, %v167
    %170 = vst [vmem:[#allocation5] sm:$0x7] %v68
    %171 = vst [vmem:[#allocation5 + $0x3] sm:$0x1] %v157
    %172 = vst [vmem:[#allocation5 + $0x4] sm:$0x1] %v169
    %173 = vst [vmem:[#allocation5 + $0x5] sm:$0x1] %v138
    %174 = vst [vmem:[#allocation5 + $0x6] sm:$0x3] 0.0
    // Predicated region
    $region22: #{tpu_custom_call.1} parent=1 // pred_check
      _
    $region23: #{tpu_custom_call.1} parent=1 // pred_check_branch
      %176 = sbr.rel (0) target = $region25
    $region24: #{tpu_custom_call.1} parent=1 // pred_region
      %178 = vsyncadd [#allocation4], 0
      %s180 = sshll.u32 [#allocation5], 4
      %s181 = int_to_ptr.vmem [resolvable:$true] %s180
      %s182 = sshll.u32 %s4, 4
      %s183 = int_to_ptr.hbm [resolvable:$true] %s182
      %185 = dma.vmem_to_hbm [thread:$0]  %s181, 128, %s183, [#allocation4]
    $region25: #{tpu_custom_call.1} parent=1 // pred_fallthru
      _
    // Predicated region
    $region26: #{tpu_custom_call.1} parent=1 // pred_check
      _
    $region27: #{tpu_custom_call.1} parent=1 // pred_check_branch
      %187 = sbr.rel (0) target = $region29
    $region28: #{tpu_custom_call.1} parent=1 // pred_region
      %189 = dma.done [#allocation4], 128
    $region29: #{tpu_custom_call.1} parent=1 // pred_fallthru
      _
    %190 = vsyncpa [#allocation3], 1
    %191 = vsyncpa [#allocation4], 1

</llo_original>
